<compile_context>
chip_gen: v7x
topology: tpu7x:2x2x1
jax: 0.10.0
libtpu: 0.0.40
codegen_flags: <defaults>
</compile_context>

<pallas_src>
import jax
import jax.numpy as jnp
from jax.experimental import pallas as pl
from jax.experimental.pallas import tpu as pltpu

_SUBLANE = 8                    # native f32 sublane tile
_LANE = 128                     # native lane tile
_X_TILE_BYTES = 8 << 20         # per-x-tile budget (BlockSpec double-buffers it)
_VMEM_LIMIT_BYTES = 48 << 20    # raised scoped-VMEM cap; safe on v5e/v6e/v7x


def _round_down(x, m):
    return (x // m) * m


def _round_up(x, m):
    return ((x + m - 1) // m) * m


def _logistic_reg_kernel(x_ref, wp_ref, b_ref, o_ref, acc_ref):
    """Grid (batch_tiles, feature_tiles); the feature axis is the reduction.

    acc[o, b] += sum_d wp[o, d] * x[b, d]    (f32 MXU accumulate)
    o[0, b]    = sigmoid(acc[0, b] + bias)   (written once, at the last k step)
    """
    k = pl.program_id(1)

    @pl.when(k == 0)
    def _():
        acc_ref[...] = jnp.zeros_like(acc_ref)

    # NT dot_general: contract the feature (lane) dim of both operands so the
    # result is (8, TB) with batch on lanes -> lane-dense output stores.
    acc_ref[...] += jax.lax.dot_general(
        wp_ref[...],
        x_ref[...],
        dimension_numbers=(((1,), (1,)), ((), ())),
        preferred_element_type=jnp.float32,
    )

    @pl.when(k == pl.num_programs(1) - 1)
    def _():
        # Only row 0 of the accumulator is the real output row.
        z = acc_ref[0:1, :] + b_ref[0]                    # (1, TB)
        # Exact sigmoid: exp runs on the EUP and is fully hidden under the x
        # DMA; exp(-z) -> inf for very negative z still yields the correct 0.
        o_ref[...] = pl.reciprocal(1.0 + jnp.exp(-z)).astype(o_ref.dtype)


def _pick_tiles(batch, features, itemsize):
    """Pick (TB, TD) batch / feature tile sizes under an ~8 MiB x-tile budget."""
    budget_elems = _X_TILE_BYTES // itemsize

    # Feature (reduction) tile: keep the full extent when a 128-row batch tile
    # of the full width fits the budget, else a lane-aligned slice (adds a
    # reduction grid axis + accumulator).
    if features * _LANE <= budget_elems:
        td = features
    else:
        td = max(_LANE, _round_down(budget_elems // _LANE, _LANE))

    # Batch tile under the budget.
    tb_cap = max(_LANE, _round_down(budget_elems // td, _LANE))
    if batch <= _LANE:
        tb = batch                       # tiny batch: one full-extent tile
    else:
        tb = min(tb_cap, _round_up(batch, _LANE))
        if batch >= 2 * _LANE:
            # Guarantee >=2 (ideally >=4/8) batch-grid steps so the "parallel"
            # axis can shard across v7x's two TensorCores and the DMA pipeline
            # has steps to overlap.
            target_steps = 8 if batch >= 16 * _LANE else (4 if batch >= 4 * _LANE else 2)
            tb = min(tb, max(_LANE, _round_down(pl.cdiv(batch, target_steps), _LANE)))
    return tb, td


def logistic_reg_forward(x, w, b):
    """x: (B, D), w: (O, D) (PyTorch nn.Linear layout), b: (O,).  O must be 1."""
    B, D = x.shape
    O = w.shape[0]
    if O != 1:
        # TODO(synk): for output_size > 1, keep a (B, O) lane-dense layout with O
        # padded to a multiple of 128 instead of this transposed single-row path.
        raise NotImplementedError("kernel is specialized for output_size=1")

    # Keep bf16 activations in bf16 through the BlockSpecs (halves HBM bytes on
    # this bandwidth-bound kernel); everything else runs in f32.  The MXU dot
    # accumulates in f32 either way.
    if x.dtype in (jnp.dtype(jnp.bfloat16), jnp.dtype(jnp.float32)):
        compute_dtype = x.dtype
    else:
        compute_dtype = jnp.dtype(jnp.float32)
    itemsize = jnp.dtype(compute_dtype).itemsize
    x_c = x.astype(compute_dtype)        # no-op when already matching

    TB, TD = _pick_tiles(B, D, itemsize)

    # When k-tiling, zero-pad the feature axis to a multiple of TD so the last
    # reduction block never reads undefined out-of-bounds data (zeros are
    # neutral in the dot).  No-op for the common small-D case.
    Dp = _round_up(D, TD)
    if Dp != D:
        x_c = jnp.pad(x_c, ((0, 0), (0, Dp - D)))

    # Sublane-pad the single weight row to the native 8-row tile so the matmul
    # M dim is tile-aligned; pad rows (and any feature tail) are zero.
    w_pad = (
        jnp.zeros((_SUBLANE, Dp), compute_dtype)
        .at[:O, :D]
        .set(w.astype(compute_dtype))
    )
    b_smem = b.astype(jnp.float32).reshape((O,))          # scalar bias in SMEM

    grid = (pl.cdiv(B, TB), pl.cdiv(Dp, TD))

    cost = pl.CostEstimate(
        flops=2 * B * D * O,
        transcendentals=B * O,
        bytes_accessed=itemsize * (B * D + O * D + B * O) + 4 * O,
    )

    out_t = pl.pallas_call(
        _logistic_reg_kernel,
        out_shape=jax.ShapeDtypeStruct((O, B), compute_dtype),
        grid_spec=pltpu.PrefetchScalarGridSpec(
            num_scalar_prefetch=0,
            grid=grid,
            in_specs=[
                pl.BlockSpec((TB, TD), lambda i, k: (i, k)),         # x tile
                pl.BlockSpec((_SUBLANE, TD), lambda i, k: (0, k)),   # weight slice
                pl.BlockSpec(memory_space=pltpu.MemorySpace.SMEM),   # bias scalar
            ],
            # (1, TB) output block: sublane dim equals the full array dim, lane
            # dim is 128-aligned (or full B) -> unmasked lane-dense stores and
            # 8x fewer output bytes than the padded (8, B) slab.
            out_specs=pl.BlockSpec((O, TB), lambda i, k: (0, i)),
            scratch_shapes=[pltpu.VMEM((_SUBLANE, TB), jnp.float32)],
        ),
        compiler_params=pltpu.CompilerParams(
            dimension_semantics=("parallel", "arbitrary"),
            vmem_limit_bytes=_VMEM_LIMIT_BYTES,
        ),
        cost_estimate=cost,
    )(x_c, w_pad, b_smem)

    # Transposed single-row slab back to (B, O), matching nn.Linear(input_size, 1).
    return out_t.T


if __name__ == "__main__":
    key = jax.random.PRNGKey(0)

    # Small shapes consistent with the module: batch=8, input_size=32, output_size=1.
    B, D, O = 8, 32, 1
    kx, kw, kb = jax.random.split(key, 3)
    x = jax.random.normal(kx, (B, D), dtype=jnp.float32)
    w = jax.random.uniform(kw, (O, D), minval=-0.1, maxval=0.1, dtype=jnp.float32)
    b = jax.random.uniform(kb, (O,), minval=-0.1, maxval=0.1, dtype=jnp.float32)

    out = jax.block_until_ready(logistic_reg_forward(x, w, b))
    ref = jax.nn.sigmoid(x @ w.T + b)
    assert out.shape == (B, O), out.shape
    assert jnp.allclose(out, ref, atol=1e-5, rtol=0.0), float(jnp.max(jnp.abs(out - ref)))

    # Second check on a slightly larger batch to exercise the multi-step
    # "parallel" batch grid (TB = 128, 4 grid steps).
    B2, D2 = 512, 256
    kx2, kw2, kb2 = jax.random.split(jax.random.PRNGKey(1), 3)
    x2 = jax.random.normal(kx2, (B2, D2), dtype=jnp.float32)
    w2 = jax.random.uniform(kw2, (O, D2), minval=-0.1, maxval=0.1, dtype=jnp.float32)
    b2 = jax.random.uniform(kb2, (O,), minval=-0.1, maxval=0.1, dtype=jnp.float32)

    out2 = jax.block_until_ready(logistic_reg_forward(x2, w2, b2))
    ref2 = jax.nn.sigmoid(x2 @ w2.T + b2)
    assert out2.shape == (B2, O), out2.shape
    assert jnp.allclose(out2, ref2, atol=1e-5, rtol=0.0), float(jnp.max(jnp.abs(out2 - ref2)))

    print("KERNEL_OK")
</pallas_src>

<mosaic_0001>
module attributes {stable_mosaic.version = 11 : i64} {
  func.func @_logistic_reg_kernel(%arg0: i32, %arg1: i32, %arg2: memref<8x32xf32, #tpu.memory_space<vmem>>, %arg3: memref<8x32xf32, #tpu.memory_space<vmem>>, %arg4: memref<1xf32, #tpu.memory_space<smem>>, %arg5: memref<1x8xf32, #tpu.memory_space<vmem>>, %arg6: memref<8x8xf32, #tpu.memory_space<vmem>>) attributes {dimension_semantics = [#tpu.dimension_semantics<parallel>, #tpu.dimension_semantics<arbitrary>], iteration_bounds = array<i64: 1, 1>, scalar_prefetch = 0 : i64, scratch_operands = 1 : i64, tpu.core_type = #tpu.core_type<tc>, window_params = [{transform_indices = @transform_0, window_bounds = array<i64: 8, 32>}, {transform_indices = @transform_1, window_bounds = array<i64: 8, 32>}, {transform_indices = @transform_2, window_bounds = array<i64: 1>}, {transform_indices = @transform_3, window_bounds = array<i64: 1, 8>}]} {
    %c0_i32 = arith.constant 0 : i32
    %0 = arith.cmpi eq, %arg1, %c0_i32 : i32
    %1 = arith.extui %0 : i1 to i32
    %c0_i32_0 = arith.constant 0 : i32
    %2 = arith.cmpi ne, %1, %c0_i32_0 : i32
    scf.if %2 {
      %cst_10 = arith.constant 0.000000e+00 : f32
      %12 = vector.broadcast %cst_10 : f32 to vector<8x8xf32>
      %c0_11 = arith.constant 0 : index
      %c0_12 = arith.constant 0 : index
      %13 = vector.load %arg6[%c0_11, %c0_12] : memref<8x8xf32, #tpu.memory_space<vmem>>, vector<8x8xf32>
      tpu.vector_store %arg6[%c0_11, %c0_12], %12 {strides = array<i32>} : memref<8x8xf32, #tpu.memory_space<vmem>>, vector<8x8xf32>,
    } else {
    }
    %c0 = arith.constant 0 : index
    %c0_1 = arith.constant 0 : index
    %3 = vector.load %arg6[%c0, %c0_1] : memref<8x8xf32, #tpu.memory_space<vmem>>, vector<8x8xf32>
    %c0_2 = arith.constant 0 : index
    %c0_3 = arith.constant 0 : index
    %4 = vector.load %arg3[%c0_2, %c0_3] : memref<8x32xf32, #tpu.memory_space<vmem>>, vector<8x32xf32>
    %c0_4 = arith.constant 0 : index
    %c0_5 = arith.constant 0 : index
    %5 = vector.load %arg2[%c0_4, %c0_5] : memref<8x32xf32, #tpu.memory_space<vmem>>, vector<8x32xf32>
    %cst = arith.constant dense<0.000000e+00> : vector<8x8xf32>
    %6 = tpu.matmul %4, %5, %cst {dimension_numbers = #tpu.dot_dimension_numbers<[1], [1], [0], [0], [0, 0, 1, 0], [], []>} : vector<8x32xf32>, vector<8x32xf32>, vector<8x8xf32> -> vector<8x8xf32>
    %7 = arith.addf %3, %6 : vector<8x8xf32>
    %c0_6 = arith.constant 0 : index
    %c0_7 = arith.constant 0 : index
    %8 = vector.load %arg6[%c0_6, %c0_7] : memref<8x8xf32, #tpu.memory_space<vmem>>, vector<8x8xf32>
    tpu.vector_store %arg6[%c0_6, %c0_7], %7 {strides = array<i32>} : memref<8x8xf32, #tpu.memory_space<vmem>>, vector<8x8xf32>,
    %c0_i32_8 = arith.constant 0 : i32
    %9 = arith.cmpi eq, %arg1, %c0_i32_8 : i32
    %10 = arith.extui %9 : i1 to i32
    %c0_i32_9 = arith.constant 0 : i32
    %11 = arith.cmpi ne, %10, %c0_i32_9 : i32
    scf.if %11 {
      %c0_10 = arith.constant 0 : index
      %c0_11 = arith.constant 0 : index
      %12 = vector.load %arg6[%c0_10, %c0_11] : memref<8x8xf32, #tpu.memory_space<vmem>>, vector<1x8xf32>
      %c0_12 = arith.constant 0 : index
      %13 = memref.load %arg4[%c0_12] : memref<1xf32, #tpu.memory_space<smem>>
      %14 = vector.broadcast %13 : f32 to vector<1x8xf32>
      %15 = arith.addf %12, %14 : vector<1x8xf32>
      %cst_13 = arith.constant 0.000000e+00 : f32
      %16 = vector.broadcast %cst_13 : f32 to vector<1x8xf32>
      %17 = arith.subf %16, %15 : vector<1x8xf32>
      %18 = math.exp %17 : vector<1x8xf32>
      %cst_14 = arith.constant 1.000000e+00 : f32
      %19 = vector.broadcast %cst_14 : f32 to vector<1x8xf32>
      %20 = arith.addf %19, %18 : vector<1x8xf32>
      %21 = tpu.reciprocal %20 : vector<1x8xf32> -> vector<1x8xf32>
      %c0_15 = arith.constant 0 : index
      %c0_16 = arith.constant 0 : index
      %22 = vector.load %arg5[%c0_15, %c0_16] : memref<1x8xf32, #tpu.memory_space<vmem>>, vector<1x8xf32>
      tpu.vector_store %arg5[%c0_15, %c0_16], %21 {strides = array<i32>} : memref<1x8xf32, #tpu.memory_space<vmem>>, vector<1x8xf32>,
    } else {
    }
    return
  }
  func.func @transform_0(%arg0: i32, %arg1: i32) -> (i32, i32) {
    %c0_i32 = arith.constant 0 : i32
    return %arg0, %arg1 : i32, i32
  }
  func.func @transform_1(%arg0: i32, %arg1: i32) -> (i32, i32) {
    %c0_i32 = arith.constant 0 : i32
    %c0_i32_0 = arith.constant 0 : i32
    return %c0_i32, %arg1 : i32, i32
  }
  func.func @transform_2(%arg0: i32, %arg1: i32) -> i32 {
    %c0_i32 = arith.constant 0 : i32
    %c0_i32_0 = arith.constant 0 : i32
    return %c0_i32 : i32
  }
  func.func @transform_3(%arg0: i32, %arg1: i32) -> (i32, i32) {
    %c0_i32 = arith.constant 0 : i32
    %c0_i32_0 = arith.constant 0 : i32
    return %c0_i32, %arg0 : i32, i32
  }
}

</mosaic_0001>

<llo_original>
// kernel: tpu_custom_call.1
$region0: #{tpu_custom_call.1}
  #allocation0 [shape = 'u32[]', space=smem, size = 0x4, offset = 0x4, fixed_abs, tag = 'smem constant byte address 0x4 - core index']
  #allocation1 [shape = 'u32[144,128]{1,0:T(1,128)}', space=vmem, size = 0x12000, scoped, tag = 'internal scratch']
  #allocation2 [shape = 'f32[8,8]{1,0:T(8,128)}', space=vmem, size = 0x1000, scoped, tag = 'scratch operand']
  #allocation3 [shape = 'f32[1]{0:T(128)S(6)}', space=smem, size = 0x200, scoped, tag = 'scoped memory for tpu_custom_call.1']
  %s0 = inlined_call_operand.hbm [shape: f32[8,32], index: 0, kind: input, shape index: {}]
  %s1 = inlined_call_operand.hbm [shape: f32[8,32], index: 1, kind: input, shape index: {}]
  %s2 = inlined_call_operand.<no memory space> [shape: f32[1], index: 2, kind: input, shape index: {}]
  %s3 = inlined_call_operand.hbm [shape: f32[1,8], index: 3, kind: output, shape index: {}]
  %s4 = sld [smem:[#allocation0]]
  $region38: #{tpu_custom_call.1} parent=0
    _
  %s6 = ssub.s32 1, %s4
  %s7 = scalar_select 0, %s6, %s4
  %8 = sst [smem:[#allocation3]] %s2
  $region1: #{tpu_custom_call.1} parent=0
    #allocation4 [shape = 'u8[4096]{0}', space=vmem, size = 0x1000, scoped, tag = 'input window, operand 0, single buffered']
    #allocation5 [shape = 's32[1]{0}', space=sflag, size = 0x4, scoped, tag = 'scoped memory for tpu_custom_call.1']
    #allocation6 [shape = 's32[1]{0}', space=sflag, size = 0x4, scoped, tag = 'scoped memory for tpu_custom_call.1']
    #allocation7 [shape = 'u8[4096]{0}', space=vmem, size = 0x1000, scoped, tag = 'input window, operand 1, single buffered']
    #allocation8 [shape = 's32[1]{0}', space=sflag, size = 0x4, scoped, tag = 'scoped memory for tpu_custom_call.1']
    #allocation9 [shape = 'u8[512]{0}', space=vmem, size = 0x400, scoped, tag = 'output window, operand 0, single buffered']
    %9 = vsyncpa [#allocation5], 0
    %10 = vsyncpa [#allocation8], 0
    %11 = vsyncpa [#allocation6], 0
    // Predicated region
    $region2: #{tpu_custom_call.1} parent=1 // pred_check
      _
    $region3: #{tpu_custom_call.1} parent=1 // pred_check_branch
      %13 = sbr.rel (0) target = $region5
    $region4: #{tpu_custom_call.1} parent=1 // pred_region
      %s15 = ssub.s32 128, 128
      %16 = vsyncadd [#allocation5], %s15
      %s18 = sshll.u32 [#allocation4], 4
      %s19 = int_to_ptr.vmem [resolvable:$true] %s18
      %21 = dma.hbm_to_vmem [thread:$0]  %s0, 128, %s19, [#allocation5]
    $region5: #{tpu_custom_call.1} parent=1 // pred_fallthru
      _
    // Predicated region
    $region6: #{tpu_custom_call.1} parent=1 // pred_check
      _
    $region7: #{tpu_custom_call.1} parent=1 // pred_check_branch
      %23 = sbr.rel (0) target = $region9
    $region8: #{tpu_custom_call.1} parent=1 // pred_region
      %s25 = ssub.s32 128, 128
      %26 = vsyncadd [#allocation8], %s25
      %s28 = sshll.u32 [#allocation7], 4
      %s29 = int_to_ptr.vmem [resolvable:$true] %s28
      %31 = dma.hbm_to_vmem [thread:$0]  %s1, 128, %s29, [#allocation8]
    $region9: #{tpu_custom_call.1} parent=1 // pred_fallthru
      _
    // Predicated region
    $region10: #{tpu_custom_call.1} parent=1 // pred_check
      _
    $region11: #{tpu_custom_call.1} parent=1 // pred_check_branch
      %33 = sbr.rel (0) target = $region13
    $region12: #{tpu_custom_call.1} parent=1 // pred_region
      _
    $region13: #{tpu_custom_call.1} parent=1 // pred_fallthru
      _
    // Predicated region
    $region14: #{tpu_custom_call.1} parent=1 // pred_check
      _
    $region15: #{tpu_custom_call.1} parent=1 // pred_check_branch
      %35 = sbr.rel (0) target = $region17
    $region16: #{tpu_custom_call.1} parent=1 // pred_region
      %36 = dma.done [#allocation5], 128
    $region17: #{tpu_custom_call.1} parent=1 // pred_fallthru
      _
    // Predicated region
    $region18: #{tpu_custom_call.1} parent=1 // pred_check
      _
    $region19: #{tpu_custom_call.1} parent=1 // pred_check_branch
      %38 = sbr.rel (0) target = $region21
    $region20: #{tpu_custom_call.1} parent=1 // pred_region
      %39 = dma.done [#allocation8], 128
    $region21: #{tpu_custom_call.1} parent=1 // pred_fallthru
      _
    %p40 = scmp.eq.s32.totalorder 0, 0
    // Predicated region
    $region22: #{tpu_custom_call.1} parent=1 // pred_check
      %p41 = pneg %p40
    $region23: #{tpu_custom_call.1} parent=1 // pred_check_branch
      %43 = sbr.rel (%p41) target = $region25
    $region24: #{tpu_custom_call.1} parent=1 // pred_region
      %vm44 = vcmask 64512
      %45 = vst.msk [vmem:[#allocation2] sm:$0xff] %vm44, 0.0
    $region25: #{tpu_custom_call.1} parent=1 // pred_fallthru
      _
    %v46 = vld [vmem:[#allocation2] sm:$0xff]
    %v47 = vld [vmem:[#allocation7] sm:$0xff]
    %v48 = vld [vmem:[#allocation4] sm:$0xff]
    %vm49 = vcmask 261120
    %v51 = vsel %vm49, %v47, 0
    %v54 = vsel %vm49, %v48, 0
    %56 = vmatprep.subr.mxu0 0.0
    %57 = vmatpush1.xpose.msra.mxu0 %v54
    %58 = vmatprep.subr.mxu0 0.0
    %59 = vmatpush1.xpose.msra.mxu0 0.0
    %60 = vmatprep.subr.mxu0 0.0
    %61 = vmatpush1.xpose.msra.mxu0 0.0
    %62 = vmatprep.subr.mxu0 0.0
    %63 = vmatpush1.xpose.msra.mxu0 0.0
    %64 = vmatprep.subr.mxu0 0.0
    %65 = vmatpush1.xpose.msra.mxu0 0.0
    %66 = vmatprep.subr.mxu0 0.0
    %67 = vmatpush1.xpose.msra.mxu0 0.0
    %68 = vmatprep.subr.mxu0 0.0
    %69 = vmatpush1.xpose.msra.mxu0 0.0
    %70 = vmatprep.subr.mxu0 0.0
    %71 = vmatpush1.xpose.msra.mxu0 0.0
    %72 = vmatprep.subr.mxu0 0.0
    %73 = vmatpush1.xpose.msra.mxu0 0.0
    %74 = vmatprep.subr.mxu0 0.0
    %75 = vmatpush1.xpose.msra.mxu0 0.0
    %76 = vmatprep.subr.mxu0 0.0
    %77 = vmatpush1.xpose.msra.mxu0 0.0
    %78 = vmatprep.subr.mxu0 0.0
    %79 = vmatpush1.xpose.msra.mxu0 0.0
    %80 = vmatprep.subr.mxu0 0.0
    %81 = vmatpush1.xpose.msra.mxu0 0.0
    %82 = vmatprep.subr.mxu0 0.0
    %83 = vmatpush1.xpose.msra.mxu0 0.0
    %84 = vmatprep.subr.mxu0 0.0
    %85 = vmatpush1.xpose.msra.mxu0 0.0
    %86 = vmatprep.subr.mxu0 0.0
    %87 = vmatpush1.xpose.msra.mxu0 0.0
    %88 = vmatprep.subr.mxu0 0.0
    %89 = vmatpush1.xpose.msra.mxu0 0.0
    %90 = vmatprep.subr.mxu0 0.0
    %91 = vmatpush1.xpose.msra.mxu0 0.0
    %92 = vmatprep.subr.mxu0 0.0
    %93 = vmatpush1.xpose.msra.mxu0 0.0
    %94 = vmatprep.subr.mxu0 0.0
    %95 = vmatpush1.xpose.msra.mxu0 0.0
    %96 = vmatprep.subr.mxu0 0.0
    %97 = vmatpush1.xpose.msra.mxu0 0.0
    %98 = vmatprep.subr.mxu0 0.0
    %99 = vmatpush1.xpose.msra.mxu0 0.0
    %100 = vmatprep.subr.mxu0 0.0
    %101 = vmatpush1.xpose.msra.mxu0 0.0
    %102 = vmatprep.subr.mxu0 0.0
    %103 = vmatpush1.xpose.msra.mxu0 0.0
    %104 = vmatprep.subr.mxu0 0.0
    %105 = vmatpush1.xpose.msra.mxu0 0.0
    %106 = vmatprep.subr.mxu0 0.0
    %107 = vmatpush1.xpose.msra.mxu0 0.0
    %108 = vmatprep.subr.mxu0 0.0
    %109 = vmatpush1.xpose.msra.mxu0 0.0
    %110 = vmatprep.subr.mxu0 0.0
    %111 = vmatpush1.xpose.msra.mxu0 0.0
    %112 = vmatprep.subr.mxu0 0.0
    %113 = vmatpush1.xpose.msra.mxu0 0.0
    %114 = vmatprep.subr.mxu0 0.0
    %115 = vmatpush1.xpose.msra.mxu0 0.0
    %116 = vmatprep.subr.mxu0 0.0
    %117 = vmatpush1.xpose.msra.mxu0 0.0
    %118 = vmatprep.subr.mxu0 0.0
    %119 = vmatpush1.xpose.msra.mxu0 0.0
    %120 = vmatprep.mubr.f32.mxu0 0.0
    %121 = vmatmul.mubr.f32.gmra.mrb[0].mxu0 %v51
    %v122 = vpop.f32.mrb[0].mxu0
    %v123 = vadd.f32 0.0, %v122
    %v124 = vpop.f32.mrb[0].mxu0
    %125 = vdwg.mxu0
    %v126 = vadd.f32 %v46, %v123
    %vm127 = vcmask 64512
    %128 = vst.msk [vmem:[#allocation2] sm:$0xff] %vm127, %v126
    // Predicated region
    $region26: #{tpu_custom_call.1} parent=1 // pred_check
      %p129 = pneg %p40
    $region27: #{tpu_custom_call.1} parent=1 // pred_check_branch
      %131 = sbr.rel (%p129) target = $region29
    $region28: #{tpu_custom_call.1} parent=1 // pred_region
      %v132 = vld [vmem:[#allocation2] sm:$0x1]
      %s133 = sld [smem:[#allocation3]]
      %v134 = vstv %s133
      %v135 = vadd.f32 %v132, %v134
      %v136 = vsub.f32 0.0, %v135
      %v137 = vmul.f32 %v136, 1.442695
      %v138 = vpow.pop %v137
      %v139 = vadd.f32 %v138, 1.0
      %v140 = vrcp.pop %v139
      %vm141 = vcmask 57344
      %142 = vst.msk [vmem:[#allocation9] sm:$0x1] %vm141, %v140
    $region29: #{tpu_custom_call.1} parent=1 // pred_fallthru
      _
    // Predicated region
    $region30: #{tpu_custom_call.1} parent=1 // pred_check
      _
    $region31: #{tpu_custom_call.1} parent=1 // pred_check_branch
      %144 = sbr.rel (0) target = $region33
    $region32: #{tpu_custom_call.1} parent=1 // pred_region
      %s146 = ssub.s32 16, 16
      %147 = vsyncadd [#allocation6], %s146
      %s149 = sshll.u32 [#allocation9], 4
      %s150 = int_to_ptr.vmem [resolvable:$true] %s149
      %152 = dma.vmem_to_hbm [thread:$0]  %s150, 16, %s3, [#allocation6]
    $region33: #{tpu_custom_call.1} parent=1 // pred_fallthru
      _
    // Predicated region
    $region34: #{tpu_custom_call.1} parent=1 // pred_check
      _
    $region35: #{tpu_custom_call.1} parent=1 // pred_check_branch
      %154 = sbr.rel (0) target = $region37
    $region36: #{tpu_custom_call.1} parent=1 // pred_region
      %155 = dma.done [#allocation6], 16
    $region37: #{tpu_custom_call.1} parent=1 // pred_fallthru
      _
    %156 = vsyncpa [#allocation5], 1
    %157 = vsyncpa [#allocation8], 1
    %158 = vsyncpa [#allocation6], 1

</llo_original>
